<compile_context>
chip_gen: v6e
topology: v6e:2x2x1
jax: 0.10.0
libtpu: 0.0.40
codegen_flags: <defaults>
</compile_context>

<pallas_src>
import functools

import jax
import jax.numpy as jnp
from jax.experimental import pallas as pl
from jax.experimental.pallas import tpu as pltpu

IN_FEATURES = 32        # observation dim fed to the linear head
OUT_ACTIONS = 5         # `network_injector(5, ...)` -> 5 outputs
DEFAULT_MAX_TILE_B = 2048   # upper bound on batch-tile rows (multiple of 8)


def _linear_kernel(x_ref, w_ref, b_ref, o_ref):
    # x_ref: (TB, F), w_ref: (F, A), b_ref: (1, A), o_ref: (TB, A)
    # NOTE: f32 inputs through the MXU use the default (bf16 multi-pass)
    # precision; within 1e-5 of a true f32 matmul for this head.  Pass bf16
    # x/W directly if callers have it — the accumulator stays f32.
    acc = jnp.dot(x_ref[...], w_ref[...], preferred_element_type=jnp.float32)
    o_ref[...] = (acc + b_ref[...]).astype(o_ref.dtype)


def _cost(rows, feats, acts, bytes_per_elem=4):
    return pl.CostEstimate(
        flops=2 * rows * feats * acts,
        transcendentals=0,
        bytes_accessed=(rows * feats + feats * acts + acts
                        + rows * acts) * bytes_per_elem,
    )


def _choose_tile_b(batch, max_tile):
    """Pick a batch-tile size: multiple of 8, tiles as even-count as possible
    (v7x megacore balance), capped at max_tile."""
    if batch <= max_tile:
        return batch
    n_tiles = pl.cdiv(batch, max_tile)
    n_tiles += n_tiles % 2                      # even tile count for 2 TCs
    tile_b = pl.cdiv(batch, n_tiles)
    tile_b = pl.cdiv(tile_b, 8) * 8             # sublane-friendly rows
    return tile_b


def _forward_single_block(x, w, b):
    """Small batch: one kernel invocation, no grid, full arrays in VMEM."""
    B, F = x.shape
    A = w.shape[1]
    return pl.pallas_call(
        _linear_kernel,
        out_shape=jax.ShapeDtypeStruct((B, A), x.dtype),
        in_specs=[
            pl.BlockSpec(memory_space=pltpu.MemorySpace.VMEM),
            pl.BlockSpec(memory_space=pltpu.MemorySpace.VMEM),
            pl.BlockSpec(memory_space=pltpu.MemorySpace.VMEM),
        ],
        out_specs=pl.BlockSpec(memory_space=pltpu.MemorySpace.VMEM),
        cost_estimate=_cost(B, F, A),
    )(x, w, b)


def _forward_tiled(x, w, b, tile_b):
    """Large batch: tile the batch axis, keep W/b VMEM-resident.

    No x padding / output slicing: Pallas clips the final partial block, and
    rows are independent so out-of-bounds rows in the last input tile never
    influence valid output rows.
    """
    B, F = x.shape
    A = w.shape[1]
    n_tiles = pl.cdiv(B, tile_b)
    return pl.pallas_call(
        _linear_kernel,
        out_shape=jax.ShapeDtypeStruct((B, A), x.dtype),
        grid_spec=pltpu.PrefetchScalarGridSpec(
            num_scalar_prefetch=0,
            grid=(n_tiles,),
            in_specs=[
                pl.BlockSpec((tile_b, F), lambda i: (i, 0)),
                pl.BlockSpec((F, A), lambda i: (0, 0)),
                pl.BlockSpec((1, A), lambda i: (0, 0)),
            ],
            out_specs=pl.BlockSpec((tile_b, A), lambda i: (i, 0)),
        ),
        compiler_params=pltpu.CompilerParams(
            dimension_semantics=("parallel",)),
        cost_estimate=_cost(B, F, A),
    )(x, w, b)


@functools.partial(jax.jit, static_argnames=("max_tile_b",))
def behavior_cloning_forward(x, w, b, *, max_tile_b=DEFAULT_MAX_TILE_B):
    """y = x @ w + b  (Pallas TPU kernel, exact-width output).

    x: (B, F) float32 (or bfloat16)
    w: (F, A) float32  (PyTorch weight stored pre-transposed)
    b: (1, A) float32
    returns: (B, A) in x.dtype
    """
    B, F = x.shape
    Fw, A = w.shape
    assert F == Fw
    assert b.shape == (1, A)

    if B <= max_tile_b:
        return _forward_single_block(x, w, b)
    tile_b = _choose_tile_b(B, max_tile_b)
    return _forward_tiled(x, w, b, tile_b)


def init_params(key, in_features=IN_FEATURES, out_actions=OUT_ACTIONS):
    """Deterministic init mimicking nn.Linear: U(-1/sqrt(F), 1/sqrt(F)).

    Params are produced directly in the kernel's layout (W as (F, A), b as
    (1, A)) so the forward path does zero per-call preparation.
    """
    kw, kb = jax.random.split(key)
    bound = 1.0 / jnp.sqrt(jnp.float32(in_features))
    # PyTorch stores weight as (out, in); we keep it transposed (in, out).
    w = jax.random.uniform(kw, (in_features, out_actions), jnp.float32,
                           minval=-bound, maxval=bound)
    b = jax.random.uniform(kb, (1, out_actions), jnp.float32,
                           minval=-bound, maxval=bound)
    return w, b


if __name__ == "__main__":
    key = jax.random.PRNGKey(0)
    kx, kx2, kp = jax.random.split(key, 3)
    w, b = init_params(kp)

    # Small batch -> gridless single-block path.
    batch = 8
    x = jax.random.normal(kx, (batch, IN_FEATURES), jnp.float32)
    y = behavior_cloning_forward(x, w, b)
    jax.block_until_ready(y)
    y_ref = x @ w + b
    assert y.shape == (batch, OUT_ACTIONS)
    assert jnp.allclose(y, y_ref, atol=1e-5, rtol=1e-5)

    # Larger batch, not a multiple of the tile -> batch-tiled path with a
    # clipped final block (no x padding, no post-slice).
    big_batch = 2500
    x2 = jax.random.normal(kx2, (big_batch, IN_FEATURES), jnp.float32)
    y2 = behavior_cloning_forward(x2, w, b)
    jax.block_until_ready(y2)
    y2_ref = x2 @ w + b
    assert y2.shape == (big_batch, OUT_ACTIONS)
    assert jnp.allclose(y2, y2_ref, atol=1e-5, rtol=1e-5)

    print("KERNEL_OK")
</pallas_src>

<mosaic_0001>
module attributes {stable_mosaic.version = 11 : i64} {
  func.func @_linear_kernel(%arg0: memref<8x32xf32, #tpu.memory_space<vmem>>, %arg1: memref<32x5xf32, #tpu.memory_space<vmem>>, %arg2: memref<1x5xf32, #tpu.memory_space<vmem>>, %arg3: memref<8x5xf32, #tpu.memory_space<vmem>>) attributes {dimension_semantics = [], scalar_prefetch = 0 : i64, scratch_operands = 0 : i64, tpu.core_type = #tpu.core_type<tc>} {
    %c0 = arith.constant 0 : index
    %c0_0 = arith.constant 0 : index
    %0 = vector.load %arg0[%c0, %c0_0] : memref<8x32xf32, #tpu.memory_space<vmem>>, vector<8x32xf32>
    %c0_1 = arith.constant 0 : index
    %c0_2 = arith.constant 0 : index
    %1 = vector.load %arg1[%c0_1, %c0_2] : memref<32x5xf32, #tpu.memory_space<vmem>>, vector<32x5xf32>
    %cst = arith.constant dense<0.000000e+00> : vector<8x5xf32>
    %2 = tpu.matmul %0, %1, %cst {dimension_numbers = #tpu.dot_dimension_numbers<[1], [0], [0], [1], [0, 0, 1, 1], [], []>} : vector<8x32xf32>, vector<32x5xf32>, vector<8x5xf32> -> vector<8x5xf32>
    %c0_3 = arith.constant 0 : index
    %c0_4 = arith.constant 0 : index
    %3 = vector.load %arg2[%c0_3, %c0_4] : memref<1x5xf32, #tpu.memory_space<vmem>>, vector<1x5xf32>
    %4 = vector.broadcast %3 : vector<1x5xf32> to vector<8x5xf32>
    %5 = arith.addf %2, %4 : vector<8x5xf32>
    %c0_5 = arith.constant 0 : index
    %c0_6 = arith.constant 0 : index
    %6 = vector.load %arg3[%c0_5, %c0_6] : memref<8x5xf32, #tpu.memory_space<vmem>>, vector<8x5xf32>
    tpu.vector_store %arg3[%c0_5, %c0_6], %5 {strides = array<i32>} : memref<8x5xf32, #tpu.memory_space<vmem>>, vector<8x5xf32>,
    return
  }
}

</mosaic_0001>

<llo_original>
// kernel: behavior_cloning_forward.1
$region0: #{behavior_cloning_forward.1}
  #allocation0 [shape = 'u32[]', space=smem, size = 0x4, offset = 0x4, fixed_abs, tag = 'smem constant byte address 0x4 - core index']
  #allocation1 [shape = 'u32[144,128]{1,0:T(1,128)}', space=vmem, size = 0x12000, scoped, tag = 'internal scratch']
  %s0 = inlined_call_operand.vmem [shape: f32[8,32], index: 0, kind: input, shape index: {}]
  %s1 = inlined_call_operand.vmem [shape: f32[32,5], index: 1, kind: input, shape index: {}]
  %s2 = inlined_call_operand.vmem [shape: f32[1,5], index: 2, kind: input, shape index: {}]
  %s3 = inlined_call_operand.hbm [shape: f32[8,5], index: 3, kind: output, shape index: {}]
  %s4 = sld [smem:[#allocation0]]
  $region22: #{behavior_cloning_forward.1} parent=0
    _
  %s6 = ssub.s32 1, %s4
  %s7 = scalar_select 0, %s6, %s4
  $region1: #{behavior_cloning_forward.1} parent=0
    #allocation2 [shape = 'u8[4096]{0}', space=vmem, size = 0x1000, scoped, tag = 'output window, operand 0, single buffered']
    #allocation3 [shape = 's32[1]{0}', space=sflag, size = 0x4, scoped, tag = 'scoped memory for behavior_cloning_forward.1']
    %8 = vsyncpa [#allocation3], 0
    // Predicated region
    $region2: #{behavior_cloning_forward.1} parent=1 // pred_check
      _
    $region3: #{behavior_cloning_forward.1} parent=1 // pred_check_branch
      %10 = sbr.rel (0) target = $region5
    $region4: #{behavior_cloning_forward.1} parent=1 // pred_region
      _
    $region5: #{behavior_cloning_forward.1} parent=1 // pred_fallthru
      _
    // Predicated region
    $region6: #{behavior_cloning_forward.1} parent=1 // pred_check
      _
    $region7: #{behavior_cloning_forward.1} parent=1 // pred_check_branch
      %12 = sbr.rel (0) target = $region9
    $region8: #{behavior_cloning_forward.1} parent=1 // pred_region
      _
    $region9: #{behavior_cloning_forward.1} parent=1 // pred_fallthru
      _
    // Predicated region
    $region10: #{behavior_cloning_forward.1} parent=1 // pred_check
      _
    $region11: #{behavior_cloning_forward.1} parent=1 // pred_check_branch
      %14 = sbr.rel (0) target = $region13
    $region12: #{behavior_cloning_forward.1} parent=1 // pred_region
      _
    $region13: #{behavior_cloning_forward.1} parent=1 // pred_fallthru
      _
    %v15 = vld [vmem:[%s0] sm:$0xff]
    %v16 = vld [vmem:[%s1] sm:$0xff]
    %v17 = vld [vmem:[%s1 + $0x8] sm:$0xff]
    %v18 = vld [vmem:[%s1 + $0x10] sm:$0xff]
    %v19 = vld [vmem:[%s1 + $0x18] sm:$0xff]
    %v20 = vld [vmem:[%s2] sm:$0x1]
    %v22 = vlaneseq
    %v23 = vshrl.u32 %v22, 7
    %v24 = vsub.s32 0, %v23
    %v25 = vrot.slane %v20, %v24
    %vm27 = vcmask 261120
    %v29 = vsel %vm27, %v15, 0
    %31 = vmatprep.subr.mxu0 0.0
    %32 = vmatpush1.msra.mxu0 0.0
    %33 = vmatprep.subr.mxu0 0.0
    %34 = vmatpush1.msra.mxu0 0.0
    %35 = vmatprep.subr.mxu0 0.0
    %36 = vmatpush1.msra.mxu0 0.0
    %37 = vmatprep.subr.mxu0 0.0
    %38 = vmatpush1.msra.mxu0 0.0
    %39 = vmatprep.subr.mxu0 0.0
    %40 = vmatpush1.msra.mxu0 0.0
    %41 = vmatprep.subr.mxu0 0.0
    %42 = vmatpush1.msra.mxu0 0.0
    %43 = vmatprep.subr.mxu0 0.0
    %44 = vmatpush1.msra.mxu0 0.0
    %45 = vmatprep.subr.mxu0 0.0
    %46 = vmatpush1.msra.mxu0 0.0
    %47 = vmatprep.subr.mxu0 0.0
    %48 = vmatpush1.msra.mxu0 0.0
    %49 = vmatprep.subr.mxu0 0.0
    %50 = vmatpush1.msra.mxu0 0.0
    %51 = vmatprep.subr.mxu0 0.0
    %52 = vmatpush1.msra.mxu0 0.0
    %53 = vmatprep.subr.mxu0 0.0
    %54 = vmatpush1.msra.mxu0 0.0
    %55 = vmatprep.subr.mxu0 0.0
    %56 = vmatpush1.msra.mxu0 %v19
    %57 = vmatprep.subr.mxu0 0.0
    %58 = vmatpush1.msra.mxu0 %v18
    %59 = vmatprep.subr.mxu0 0.0
    %60 = vmatpush1.msra.mxu0 %v17
    %61 = vmatprep.subr.mxu0 0.0
    %62 = vmatpush1.msra.mxu0 %v16
    %63 = vmatprep.subr.mxu0 0.0
    %64 = vmatpush2.msra.mxu0 0.0
    %65 = vmatprep.subr.mxu0 0.0
    %66 = vmatpush2.msra.mxu0 0.0
    %67 = vmatprep.subr.mxu0 0.0
    %68 = vmatpush2.msra.mxu0 0.0
    %69 = vmatprep.subr.mxu0 0.0
    %70 = vmatpush2.msra.mxu0 0.0
    %71 = vmatprep.subr.mxu0 0.0
    %72 = vmatpush2.msra.mxu0 0.0
    %73 = vmatprep.subr.mxu0 0.0
    %74 = vmatpush2.msra.mxu0 0.0
    %75 = vmatprep.subr.mxu0 0.0
    %76 = vmatpush2.msra.mxu0 0.0
    %77 = vmatprep.subr.mxu0 0.0
    %78 = vmatpush2.msra.mxu0 0.0
    %79 = vmatprep.subr.mxu0 0.0
    %80 = vmatpush2.msra.mxu0 0.0
    %81 = vmatprep.subr.mxu0 0.0
    %82 = vmatpush2.msra.mxu0 0.0
    %83 = vmatprep.subr.mxu0 0.0
    %84 = vmatpush2.msra.mxu0 0.0
    %85 = vmatprep.subr.mxu0 0.0
    %86 = vmatpush2.msra.mxu0 0.0
    %87 = vmatprep.subr.mxu0 0.0
    %88 = vmatpush2.msra.mxu0 0.0
    %89 = vmatprep.subr.mxu0 0.0
    %90 = vmatpush2.msra.mxu0 0.0
    %91 = vmatprep.subr.mxu0 0.0
    %92 = vmatpush2.msra.mxu0 0.0
    %93 = vmatprep.subr.mxu0 0.0
    %94 = vmatpush2.msra.mxu0 0.0
    %95 = vmatprep.mubr.f32.mxu0 0.0
    %96 = vmatmul.mubr.f32.gmra.mxu0 %v29
    %v97 = vpop.f32.mrf.mxu0
    %v98 = vadd.f32 %v25, %v97
    %v99 = vpop.f32.mrf.mxu0
    %100 = vdwg.mxu0
    %vm101 = vcmask 39936
    %102 = vst.msk [vmem:[#allocation2] sm:$0xff] %vm101, %v98
    // Predicated region
    $region14: #{behavior_cloning_forward.1} parent=1 // pred_check
      _
    $region15: #{behavior_cloning_forward.1} parent=1 // pred_check_branch
      %104 = sbr.rel (0) target = $region17
    $region16: #{behavior_cloning_forward.1} parent=1 // pred_region
      %s106 = ssub.s32 128, 128
      %107 = vsyncadd [#allocation3], %s106
      %s109 = sshll.u32 [#allocation2], 4
      %s110 = int_to_ptr.vmem [resolvable:$true] %s109
      %112 = dma.vmem_to_hbm [thread:$0]  %s110, 128, %s3, [#allocation3]
    $region17: #{behavior_cloning_forward.1} parent=1 // pred_fallthru
      _
    // Predicated region
    $region18: #{behavior_cloning_forward.1} parent=1 // pred_check
      _
    $region19: #{behavior_cloning_forward.1} parent=1 // pred_check_branch
      %114 = sbr.rel (0) target = $region21
    $region20: #{behavior_cloning_forward.1} parent=1 // pred_region
      %115 = dma.done [#allocation3], 128
    $region21: #{behavior_cloning_forward.1} parent=1 // pred_fallthru
      _
    %116 = vsyncpa [#allocation3], 1

</llo_original>
